<compile_context>
chip_gen: v7x
topology: tpu7x:2x2x1
jax: 0.10.0
libtpu: 0.0.40
codegen_flags: <defaults>
</compile_context>

<pallas_src>
import math
from functools import partial

import jax
import jax.numpy as jnp
from jax.experimental import pallas as pl
from jax.experimental.pallas import tpu as pltpu


def _round_up(a: int, b: int) -> int:
    return (a + b - 1) // b * b


# ---------------------------------------------------------------------------
# Plain-JAX get_cdf: used for parameter setup of self.cdf (torch __init__) and
# as the correctness reference.  The forward hot path runs in the Pallas kernel.
# ---------------------------------------------------------------------------
def get_cdf_ref(f, *, scale: float = 1.0):
    x = scale * jnp.asarray(f, jnp.float32)
    u = (jnp.maximum(x, 0.0) + jnp.log1p(jnp.exp(-jnp.abs(x)))) / scale  # stable softplus
    trapz = jnp.sum(0.5 * (u[..., :-1] + u[..., 1:]), axis=-1, keepdims=True)
    un = u / trapz
    p = 0.5 * (un[..., :-1] + un[..., 1:])
    return jnp.cumsum(p, axis=-1)  # cumulative_trapezoid with dx=1


# ---------------------------------------------------------------------------
# Kernel: softplus -> trapz-normalize -> blocked cumulative trapezoid -> SSE.
# Each grid step handles TR rows and writes its per-tile SSE partial.
# ---------------------------------------------------------------------------
def _myw1_kernel(cdf_ref, y_ref, tri_ref, out_ref, racc_ref, *,
                 scale: float, n_rows: int, tile_rows: int, chunk: int,
                 n_chunks: int, tm1: int, need_row_mask: bool, split_mxu: bool):
    y = y_ref[...].astype(jnp.float32)        # (TR, T)
    cdf = cdf_ref[...].astype(jnp.float32)    # (TR, T-1)

    # Numerically stable softplus: log(1+exp(s*y))/s == (max(x,0)+log(1+exp(-|x|)))/s
    # (log(1+.) kept instead of log1p for guaranteed Mosaic lowering; tail diff ~1e-7)
    x = y * scale
    u = (jnp.maximum(x, 0.0) + jnp.log(1.0 + jnp.exp(-jnp.abs(x)))) * (1.0 / scale)

    # Trapezoid pieces: pair[:, i] = 0.5*(u[:, i] + u[:, i+1])
    pair = 0.5 * (u[:, :-1] + u[:, 1:])                               # (TR, T-1)
    inv_trapz = pl.reciprocal(jnp.sum(pair, axis=-1, keepdims=True))  # (TR, 1)
    if need_row_mask:
        # Padded rows (zero-filled in the wrapper) get inv_trapz = 0, so their
        # pn, cumulative value and d are exactly 0.  Only a (TR,1) compare/select.
        row = (pl.program_id(0) * tile_rows
               + jax.lax.broadcasted_iota(jnp.int32, (tile_rows, 1), 0))
        inv_trapz = jnp.where(row < n_rows, inv_trapz, 0.0)
    pn = pair * inv_trapz                                             # (TR, T-1) f32

    # bf16 MXU path; the optional hi/lo split keeps ~f32 accuracy with 2 bf16 matmuls.
    pn_hi = pn.astype(jnp.bfloat16)
    pn_lo = (pn - pn_hi.astype(jnp.float32)).astype(jnp.bfloat16) if split_mxu else None

    tri = tri_ref[...]                                                # (C, C) bf16 0/1

    racc_ref[...] = jnp.zeros_like(racc_ref)                          # (1, 128) f32
    offset = None                                                     # (TR, 1) carry
    for c in range(n_chunks):
        lo = c * chunk
        w = min(chunk, tm1 - lo)
        tri_w = tri[:w, :w]
        mm = jnp.dot(pn_hi[:, lo:lo + w], tri_w,
                     preferred_element_type=jnp.float32)              # (TR, w)
        if split_mxu:
            mm = mm + jnp.dot(pn_lo[:, lo:lo + w], tri_w,
                              preferred_element_type=jnp.float32)
        cum = mm if offset is None else mm + offset                   # blocked prefix
        d = cdf[:, lo:lo + w] - cum
        racc_ref[:, :w] += jnp.sum(d * d, axis=0, keepdims=True)      # per-lane partial
        if c + 1 < n_chunks:
            offset = cum[:, w - 1:w]                                  # f32 running offset

    # Lane-dense per-tile partial: (8,128) block with sublane 0 holding the sums.
    sub = jax.lax.broadcasted_iota(jnp.int32, (8, 128), 0)
    out_ref[0] = jnp.where(sub == 0, racc_ref[...], 0.0)


def myw1_loss(cdf, y, *, scale: float = 1.0, split_mxu: bool = True):
    """cdf: (..., T-1) precomputed CDF of `data`; y: (..., T). Returns scalar MSE."""
    y = jnp.asarray(y)
    cdf = jnp.asarray(cdf)
    T = y.shape[-1]
    Tm1 = T - 1
    if Tm1 < 1:
        raise ValueError("integration axis must have length >= 2")
    assert cdf.shape == y.shape[:-1] + (Tm1,)
    R = int(math.prod(y.shape[:-1]))

    # Keep native dtypes in HBM; the kernel upcasts to f32 internally.
    cdf2 = cdf.reshape(R, Tm1)
    y2 = y.reshape(R, T)
    iy = y2.dtype.itemsize
    ic = cdf2.dtype.itemsize

    # Blocked prefix-sum chunking of the integration axis.
    C = min(128, Tm1)
    n_chunks = -(-Tm1 // C)

    # Row tile: byte-budgeted, sublane aligned (8 f32 / 16 bf16 / 32 int8).
    align = max(8, 32 // min(iy, ic))
    row_hbm = T * iy + Tm1 * ic                                 # HBM bytes per row
    per_row_vmem = 2 * row_hbm + 8 * T + 16 * Tm1 + 2048        # 2-buf inputs + f32 temps
    budget = 16 << 20
    tr_cap = max(align, (budget // per_row_vmem) // align * align)
    tr_target = _round_up(max(-(-(2 << 20) // row_hbm), align), align)  # ~2 MiB / step
    TR = max(align, min(tr_cap, tr_target, _round_up(R, align)))
    G = -(-R // TR)
    Rpad = G * TR
    need_mask = Rpad != R
    if need_mask:
        cdf2 = jnp.pad(cdf2, ((0, Rpad - R), (0, 0)))
        y2 = jnp.pad(y2, ((0, Rpad - R), (0, 0)))

    # Upper-triangular (incl. diagonal) chunk matrix; 0/1 values are exact in bf16.
    r = jnp.arange(C, dtype=jnp.int32)
    tri = (r[:, None] <= r[None, :]).astype(jnp.bfloat16)

    denom = float(R * Tm1)  # mse_loss reduction='mean' over all true elements

    mm_passes = 2 if split_mxu else 1
    cost = pl.CostEstimate(
        flops=int(mm_passes * 2 * Rpad * Tm1 * C + 12 * Rpad * T),
        transcendentals=int(2 * Rpad * T),
        bytes_accessed=int(Rpad * row_hbm + tri.size * 2 + G * 8 * 128 * 4),
    )
    est_vmem = TR * per_row_vmem + 2 * C * C * 2 + 2 * 8 * 128 * 4 + 1024
    vmem_limit = int(min(40 << 20, max(16 << 20, int(1.5 * est_vmem) + (4 << 20))))

    kernel = partial(_myw1_kernel, scale=float(scale), n_rows=R, tile_rows=TR,
                     chunk=C, n_chunks=n_chunks, tm1=Tm1,
                     need_row_mask=need_mask, split_mxu=split_mxu)

    parts = pl.pallas_call(
        kernel,
        out_shape=jax.ShapeDtypeStruct((G, 8, 128), jnp.float32),
        grid=(G,),
        in_specs=[
            pl.BlockSpec((TR, Tm1), lambda i: (i, 0)),   # cdf tile
            pl.BlockSpec((TR, T), lambda i: (i, 0)),     # y tile
            pl.BlockSpec((C, C), lambda i: (0, 0)),      # small tri: VMEM resident
        ],
        out_specs=pl.BlockSpec((1, 8, 128), lambda i: (i, 0, 0)),
        scratch_shapes=[pltpu.VMEM((1, 128), jnp.float32)],
        compiler_params=pltpu.CompilerParams(
            dimension_semantics=("parallel",),           # per-tile partials: no carry
            vmem_limit_bytes=vmem_limit,
        ),
        cost_estimate=cost,
    )(cdf2, y2, tri)

    return jnp.sum(parts) / denom


class MyW1:
    """JAX/Pallas port of the PyTorch MyW1 module."""

    def __init__(self, *, data, scale: float = 1.0):
        self.scale = scale
        # Parameter setup (torch __init__): precompute CDF of `data` in plain JAX.
        # TODO(synk): optionally store self.cdf in bf16 to halve its HBM stream
        # (kernel already upcasts); kept f32 for bit-parity of the stored parameter.
        self.cdf = get_cdf_ref(jnp.asarray(data, jnp.float32), scale=scale)

    def forward(self, y):
        return myw1_loss(self.cdf, y, scale=self.scale)

    __call__ = forward


if __name__ == "__main__":
    key = jax.random.PRNGKey(0)
    k1, k2, k3, k4 = jax.random.split(key, 4)

    # small shapes: batch=2, channels=4, seq (last / integration axis)=16
    data = jax.random.normal(k1, (2, 4, 16), dtype=jnp.float32)
    y = jax.random.normal(k2, (2, 4, 16), dtype=jnp.float32)
    model = MyW1(data=data, scale=1.0)
    loss = jax.block_until_ready(model(y))
    ref = jnp.mean((get_cdf_ref(data, scale=1.0) - get_cdf_ref(y, scale=1.0)) ** 2)
    assert abs(float(loss) - float(ref)) < 1e-5 + 1e-3 * abs(float(ref)), (
        float(loss), float(ref))

    # second small case: exercises multi-chunk prefix-sum (T-1 > 128) + row padding
    data2 = jax.random.normal(k3, (2, 3, 200), dtype=jnp.float32)
    y2 = jax.random.normal(k4, (2, 3, 200), dtype=jnp.float32)
    model2 = MyW1(data=data2, scale=1.5)
    loss2 = jax.block_until_ready(model2(y2))
    ref2 = jnp.mean((get_cdf_ref(data2, scale=1.5) - get_cdf_ref(y2, scale=1.5)) ** 2)
    assert abs(float(loss2) - float(ref2)) < 1e-5 + 1e-3 * abs(float(ref2)), (
        float(loss2), float(ref2))

    print("KERNEL_OK")
</pallas_src>

<mosaic_0001>
module attributes {stable_mosaic.version = 11 : i64} {
  func.func @_myw1_kernel(%arg0: i32, %arg1: memref<8x15xf32, #tpu.memory_space<vmem>>, %arg2: memref<8x16xf32, #tpu.memory_space<vmem>>, %arg3: memref<15x15xbf16, #tpu.memory_space<vmem>>, %arg4: memref<1x8x128xf32, #tpu.memory_space<vmem>>, %arg5: memref<1x128xf32, #tpu.memory_space<vmem>>) attributes {dimension_semantics = [#tpu.dimension_semantics<parallel>], iteration_bounds = array<i64: 1>, scalar_prefetch = 0 : i64, scratch_operands = 1 : i64, tpu.core_type = #tpu.core_type<tc>, window_params = [{transform_indices = @transform_0, window_bounds = array<i64: 8, 15>}, {transform_indices = @transform_1, window_bounds = array<i64: 8, 16>}, {pipeline_mode = #tpu.pipeline_mode<synchronous>, transform_indices = @transform_2, window_bounds = array<i64: 15, 15>}, {transform_indices = @transform_3, window_bounds = array<i64: 1, 8, 128>}]} {
    %c0 = arith.constant 0 : index
    %c0_0 = arith.constant 0 : index
    %0 = vector.load %arg2[%c0, %c0_0] : memref<8x16xf32, #tpu.memory_space<vmem>>, vector<8x16xf32>
    %c0_1 = arith.constant 0 : index
    %c0_2 = arith.constant 0 : index
    %1 = vector.load %arg1[%c0_1, %c0_2] : memref<8x15xf32, #tpu.memory_space<vmem>>, vector<8x15xf32>
    %cst = arith.constant 1.000000e+00 : f32
    %2 = vector.broadcast %cst : f32 to vector<8x16xf32>
    %3 = arith.mulf %0, %2 : vector<8x16xf32>
    %cst_3 = arith.constant 0.000000e+00 : f32
    %4 = vector.broadcast %cst_3 : f32 to vector<8x16xf32>
    %5 = arith.maximumf %3, %4 : vector<8x16xf32>
    %6 = math.absf %3 : vector<8x16xf32>
    %cst_4 = arith.constant 0.000000e+00 : f32
    %7 = vector.broadcast %cst_4 : f32 to vector<8x16xf32>
    %8 = arith.subf %7, %6 : vector<8x16xf32>
    %9 = math.exp %8 : vector<8x16xf32>
    %cst_5 = arith.constant 1.000000e+00 : f32
    %10 = vector.broadcast %cst_5 : f32 to vector<8x16xf32>
    %11 = arith.addf %10, %9 : vector<8x16xf32>
    %12 = math.log %11 : vector<8x16xf32>
    %13 = arith.addf %5, %12 : vector<8x16xf32>
    %cst_6 = arith.constant 1.000000e+00 : f32
    %14 = vector.broadcast %cst_6 : f32 to vector<8x16xf32>
    %15 = arith.mulf %13, %14 : vector<8x16xf32>
    %16 = vector.extract_strided_slice %15 {offsets = [0, 0], sizes = [8, 15], strides = [1, 1]} : vector<8x16xf32> to vector<8x15xf32>
    %17 = vector.extract_strided_slice %15 {offsets = [0, 1], sizes = [8, 15], strides = [1, 1]} : vector<8x16xf32> to vector<8x15xf32>
    %18 = arith.addf %16, %17 : vector<8x15xf32>
    %cst_7 = arith.constant 5.000000e-01 : f32
    %19 = vector.broadcast %cst_7 : f32 to vector<8x15xf32>
    %20 = arith.mulf %19, %18 : vector<8x15xf32>
    %cst_8 = arith.constant dense<0.000000e+00> : vector<8xf32>
    %21 = vector.multi_reduction <add>, %20, %cst_8 [1] : vector<8x15xf32> to vector<8xf32>
    %22 = vector.shape_cast %21 : vector<8xf32> to vector<8x1xf32>
    %23 = tpu.reciprocal %22 : vector<8x1xf32> -> vector<8x1xf32>
    %24 = vector.broadcast %23 : vector<8x1xf32> to vector<8x15xf32>
    %25 = arith.mulf %20, %24 : vector<8x15xf32>
    %26 = arith.truncf %25 : vector<8x15xf32> to vector<8x15xbf16>
    %27 = arith.extf %26 : vector<8x15xbf16> to vector<8x15xf32>
    %28 = arith.subf %25, %27 : vector<8x15xf32>
    %29 = arith.truncf %28 : vector<8x15xf32> to vector<8x15xbf16>
    %c0_9 = arith.constant 0 : index
    %c0_10 = arith.constant 0 : index
    %30 = vector.load %arg3[%c0_9, %c0_10] : memref<15x15xbf16, #tpu.memory_space<vmem>>, vector<15x15xbf16>
    %cst_11 = arith.constant 0.000000e+00 : f32
    %31 = vector.broadcast %cst_11 : f32 to vector<1x128xf32>
    %c0_12 = arith.constant 0 : index
    %c0_13 = arith.constant 0 : index
    %32 = vector.load %arg5[%c0_12, %c0_13] : memref<1x128xf32, #tpu.memory_space<vmem>>, vector<1x128xf32>
    tpu.vector_store %arg5[%c0_12, %c0_13], %31 {strides = array<i32>} : memref<1x128xf32, #tpu.memory_space<vmem>>, vector<1x128xf32>,
    %cst_14 = arith.constant dense<0.000000e+00> : vector<8x15xf32>
    %33 = tpu.matmul %26, %30, %cst_14 {dimension_numbers = #tpu.dot_dimension_numbers<[1], [0], [0], [1], [0, 0, 1, 1], [], []>} : vector<8x15xbf16>, vector<15x15xbf16>, vector<8x15xf32> -> vector<8x15xf32>
    %cst_15 = arith.constant dense<0.000000e+00> : vector<8x15xf32>
    %34 = tpu.matmul %29, %30, %cst_15 {dimension_numbers = #tpu.dot_dimension_numbers<[1], [0], [0], [1], [0, 0, 1, 1], [], []>} : vector<8x15xbf16>, vector<15x15xbf16>, vector<8x15xf32> -> vector<8x15xf32>
    %35 = arith.addf %33, %34 : vector<8x15xf32>
    %36 = arith.subf %1, %35 : vector<8x15xf32>
    %c0_16 = arith.constant 0 : index
    %c0_17 = arith.constant 0 : index
    %37 = vector.load %arg5[%c0_16, %c0_17] : memref<1x128xf32, #tpu.memory_space<vmem>>, vector<1x15xf32>
    %38 = arith.mulf %36, %36 : vector<8x15xf32>
    %cst_18 = arith.constant dense<0.000000e+00> : vector<15xf32>
    %39 = vector.multi_reduction <add>, %38, %cst_18 [0] : vector<8x15xf32> to vector<15xf32>
    %40 = vector.shape_cast %39 : vector<15xf32> to vector<1x15xf32>
    %41 = arith.addf %37, %40 : vector<1x15xf32>
    %c0_19 = arith.constant 0 : index
    %c0_20 = arith.constant 0 : index
    %42 = vector.load %arg5[%c0_19, %c0_20] : memref<1x128xf32, #tpu.memory_space<vmem>>, vector<1x15xf32>
    tpu.vector_store %arg5[%c0_19, %c0_20], %41 {strides = array<i32>} : memref<1x128xf32, #tpu.memory_space<vmem>>, vector<1x15xf32>,
    %43 = tpu.iota {dimensions = array<i32: 0>} : vector<8x128xi32>
    %c0_i32 = arith.constant 0 : i32
    %44 = vector.broadcast %c0_i32 : i32 to vector<8x128xi32>
    %45 = arith.cmpi eq, %43, %44 : vector<8x128xi32>
    %c0_21 = arith.constant 0 : index
    %c0_22 = arith.constant 0 : index
    %46 = vector.load %arg5[%c0_21, %c0_22] : memref<1x128xf32, #tpu.memory_space<vmem>>, vector<1x128xf32>
    %cst_23 = arith.constant 0.000000e+00 : f32
    %47 = vector.shape_cast %46 : vector<1x128xf32> to vector<1x128xf32>
    %48 = vector.broadcast %47 : vector<1x128xf32> to vector<8x128xf32>
    %49 = vector.broadcast %cst_23 : f32 to vector<8x128xf32>
    %50 = arith.select %45, %48, %49 : vector<8x128xi1>, vector<8x128xf32>
    %c0_24 = arith.constant 0 : index
    %c0_25 = arith.constant 0 : index
    %c0_26 = arith.constant 0 : index
    %51 = vector.load %arg4[%c0_24, %c0_25, %c0_26] : memref<1x8x128xf32, #tpu.memory_space<vmem>>, vector<1x8x128xf32>
    %52 = vector.shape_cast %51 : vector<1x8x128xf32> to vector<8x128xf32>
    %53 = vector.shape_cast %50 : vector<8x128xf32> to vector<1x8x128xf32>
    tpu.vector_store %arg4[%c0_24, %c0_25, %c0_26], %53 {strides = array<i32>} : memref<1x8x128xf32, #tpu.memory_space<vmem>>, vector<1x8x128xf32>,
    return
  }
  func.func @transform_0(%arg0: i32) -> (i32, i32) {
    %c0_i32 = arith.constant 0 : i32
    %c0_i32_0 = arith.constant 0 : i32
    return %arg0, %c0_i32 : i32, i32
  }
  func.func @transform_1(%arg0: i32) -> (i32, i32) {
    %c0_i32 = arith.constant 0 : i32
    %c0_i32_0 = arith.constant 0 : i32
    return %arg0, %c0_i32 : i32, i32
  }
  func.func @transform_2(%arg0: i32) -> (i32, i32) {
    %c0_i32 = arith.constant 0 : i32
    %c0_i32_0 = arith.constant 0 : i32
    %c0_i32_1 = arith.constant 0 : i32
    return %c0_i32, %c0_i32_0 : i32, i32
  }
  func.func @transform_3(%arg0: i32) -> (i32, i32, i32) {
    %c0_i32 = arith.constant 0 : i32
    %c0_i32_0 = arith.constant 0 : i32
    %c0_i32_1 = arith.constant 0 : i32
    return %arg0, %c0_i32, %c0_i32_0 : i32, i32, i32
  }
}

</mosaic_0001>

<llo_original>
// kernel: tpu_custom_call.1
$region0: #{tpu_custom_call.1}
  #allocation0 [shape = 'u32[]', space=smem, size = 0x4, offset = 0x4, fixed_abs, tag = 'smem constant byte address 0x4 - core index']
  #allocation1 [shape = 'u32[144,128]{1,0:T(1,128)}', space=vmem, size = 0x12000, scoped, tag = 'internal scratch']
  #allocation2 [shape = 'f32[1,128]{1,0:T(1,128)}', space=vmem, size = 0x200, scoped, tag = 'scratch operand']
  %s0 = inlined_call_operand.hbm [shape: f32[8,15], index: 0, kind: input, shape index: {}]
  %s1 = inlined_call_operand.hbm [shape: f32[8,16], index: 1, kind: input, shape index: {}]
  %s2 = inlined_call_operand.hbm [shape: bf16[15,15], index: 2, kind: input, shape index: {}]
  %s3 = inlined_call_operand.hbm [shape: f32[1,8,128], index: 3, kind: output, shape index: {}]
  %s4 = sld [smem:[#allocation0]]
  $region34: #{tpu_custom_call.1} parent=0
    _
  %s6 = ssub.s32 1, %s4
  %s7 = scalar_select 0, %s6, %s4
  $region1: #{tpu_custom_call.1} parent=0
    #allocation3 [shape = 'u8[4096]{0}', space=vmem, size = 0x1000, scoped, tag = 'input window, operand 0, single buffered']
    #allocation4 [shape = 's32[1]{0}', space=sflag, size = 0x4, scoped, tag = 'scoped memory for tpu_custom_call.1']
    #allocation5 [shape = 's32[1]{0}', space=sflag, size = 0x4, scoped, tag = 'scoped memory for tpu_custom_call.1']
    #allocation6 [shape = 'u8[4096]{0}', space=vmem, size = 0x1000, scoped, tag = 'input window, operand 1, single buffered']
    #allocation7 [shape = 's32[1]{0}', space=sflag, size = 0x4, scoped, tag = 'scoped memory for tpu_custom_call.1']
    #allocation8 [shape = 'u8[4096]{0}', space=vmem, size = 0x1000, scoped, tag = 'input window, operand 2, single buffered']
    #allocation9 [shape = 'u8[4096]{0}', space=vmem, size = 0x1000, scoped, tag = 'output window, operand 0, single buffered']
    %8 = vsyncpa [#allocation4], 0
    %9 = vsyncpa [#allocation7], 0
    %10 = vsyncpa [#allocation5], 0
    // Predicated region
    $region2: #{tpu_custom_call.1} parent=1 // pred_check
      _
    $region3: #{tpu_custom_call.1} parent=1 // pred_check_branch
      %12 = sbr.rel (0) target = $region5
    $region4: #{tpu_custom_call.1} parent=1 // pred_region
      %s14 = ssub.s32 128, 128
      %15 = vsyncadd [#allocation4], %s14
      %s17 = sshll.u32 [#allocation3], 4
      %s18 = int_to_ptr.vmem [resolvable:$true] %s17
      %20 = dma.hbm_to_vmem [thread:$0]  %s0, 128, %s18, [#allocation4]
    $region5: #{tpu_custom_call.1} parent=1 // pred_fallthru
      _
    // Predicated region
    $region6: #{tpu_custom_call.1} parent=1 // pred_check
      _
    $region7: #{tpu_custom_call.1} parent=1 // pred_check_branch
      %22 = sbr.rel (0) target = $region9
    $region8: #{tpu_custom_call.1} parent=1 // pred_region
      %s24 = ssub.s32 128, 128
      %25 = vsyncadd [#allocation7], %s24
      %s27 = sshll.u32 [#allocation6], 4
      %s28 = int_to_ptr.vmem [resolvable:$true] %s27
      %30 = dma.hbm_to_vmem [thread:$0]  %s1, 128, %s28, [#allocation7]
    $region9: #{tpu_custom_call.1} parent=1 // pred_fallthru
      _
    // Predicated region
    $region10: #{tpu_custom_call.1} parent=1 // pred_check
      _
    $region11: #{tpu_custom_call.1} parent=1 // pred_check_branch
      %32 = sbr.rel (0) target = $region13
    $region12: #{tpu_custom_call.1} parent=1 // pred_region
      %s34 = ssub.s32 128, 128
      %35 = vsyncadd [#allocation7], %s34
      %s36 = sshll.u32 [#allocation8], 4
      %s37 = int_to_ptr.vmem [resolvable:$true] %s36
      %42 = dma.hbm_to_vmem [thread:$0]  %s2, 128, %s37, [#allocation7], 64, 64, 4
    $region13: #{tpu_custom_call.1} parent=1 // pred_fallthru
      _
    // Predicated region
    $region14: #{tpu_custom_call.1} parent=1 // pred_check
      _
    $region15: #{tpu_custom_call.1} parent=1 // pred_check_branch
      %44 = sbr.rel (0) target = $region17
    $region16: #{tpu_custom_call.1} parent=1 // pred_region
      %45 = dma.done [#allocation4], 128
    $region17: #{tpu_custom_call.1} parent=1 // pred_fallthru
      _
    // Predicated region
    $region18: #{tpu_custom_call.1} parent=1 // pred_check
      _
    $region19: #{tpu_custom_call.1} parent=1 // pred_check_branch
      %47 = sbr.rel (0) target = $region21
    $region20: #{tpu_custom_call.1} parent=1 // pred_region
      %48 = dma.done [#allocation7], 128
    $region21: #{tpu_custom_call.1} parent=1 // pred_fallthru
      _
    // Predicated region
    $region22: #{tpu_custom_call.1} parent=1 // pred_check
      _
    $region23: #{tpu_custom_call.1} parent=1 // pred_check_branch
      %50 = sbr.rel (0) target = $region25
    $region24: #{tpu_custom_call.1} parent=1 // pred_region
      %51 = dma.done [#allocation7], 128
    $region25: #{tpu_custom_call.1} parent=1 // pred_fallthru
      _
    %v53 = vld [vmem:[#allocation6] sm:$0xff]
    %v54 = vld [vmem:[#allocation3] sm:$0xff]
    %v55 = vmax.f32 %v53, 0.0
    %v56 = vand.u32 2147483647, %v53
    %v57 = vsub.f32 0.0, %v56
    %v58 = vmul.f32 %v57, 1.442695
    %v59 = vpow.pop %v58
    %v60 = vadd.f32 %v59, 1.0
    %v61 = vlog2.pop %v60
    %v62 = vmul.f32 %v61, 0.6931472
    %v63 = vadd.f32 %v55, %v62
    %65 = vrot.lane.b32.xlu0 %v63, 127
    %v66 = vpop.permute.xlu0 %65
    %v68 = vadd.f32 %v63, %v66
    %v69 = vmul.f32 %v68, 0.5
    %vm70 = vcmask 121856
    %v71 = vsel %vm70, %v69, 0.0
    %72 = vadd.xlane.f32.xlu0 %v71
    %v73 = vpop.xlane.xlu0 %72
    %v74 = vrcp.pop %v73
    %v75 = vmul.f32 %v69, %v74
    %v76 = vpack.c.bf16 %v75, %v75
    %v77 = vunpack.c.l.bf16 %v76
    %v78 = vsub.f32 %v75, %v77
    %v79 = vpack.c.bf16 %v78, %v78
    %v80 = vld [vmem:[#allocation8] sm:$0xf]
    %v81 = vld [vmem:[#allocation8 + $0x4] sm:$0xf]
    %82 = vst [vmem:[#allocation2] sm:$0x1] 0.0
    %v85 = vunpack.c.l.b16 %v80
    %v86 = vunpack.c.l.b16 %v81
    %v87 = vpack.c.b16 %v86, %v85
    %v89 = vsel %vm70, %v79, 0
    %vm91 = vcmask 1046528
    %vm92 = vcmask 1047552
    %v93 = vsel %vm91, 4294967295, 65535
    %v94 = vsel %vm92, %v93, 0
    %v96 = vand.u32 %v87, %v94
    %98 = vmatprep.subr.bf16.mxu0 0
    %99 = vmatpush1.bf16.msra.mxu0 %v96
    %100 = vmatprep.subr.bf16.mxu0 0
    %101 = vmatpush1.bf16.msra.mxu0 0
    %102 = vmatprep.subr.bf16.mxu0 0
    %103 = vmatpush1.bf16.msra.mxu0 0
    %104 = vmatprep.subr.bf16.mxu0 0
    %105 = vmatpush1.bf16.msra.mxu0 0
    %106 = vmatprep.subr.bf16.mxu0 0
    %107 = vmatpush1.bf16.msra.mxu0 0
    %108 = vmatprep.subr.bf16.mxu0 0
    %109 = vmatpush1.bf16.msra.mxu0 0
    %110 = vmatprep.subr.bf16.mxu0 0
    %111 = vmatpush1.bf16.msra.mxu0 0
    %112 = vmatprep.subr.bf16.mxu0 0
    %113 = vmatpush1.bf16.msra.mxu0 0
    %114 = vmatprep.subr.bf16.mxu0 0
    %115 = vmatpush1.bf16.msra.mxu0 0
    %116 = vmatprep.subr.bf16.mxu0 0
    %117 = vmatpush1.bf16.msra.mxu0 0
    %118 = vmatprep.subr.bf16.mxu0 0
    %119 = vmatpush1.bf16.msra.mxu0 0
    %120 = vmatprep.subr.bf16.mxu0 0
    %121 = vmatpush1.bf16.msra.mxu0 0
    %122 = vmatprep.subr.bf16.mxu0 0
    %123 = vmatpush1.bf16.msra.mxu0 0
    %124 = vmatprep.subr.bf16.mxu0 0
    %125 = vmatpush1.bf16.msra.mxu0 0
    %126 = vmatprep.subr.bf16.mxu0 0
    %127 = vmatpush1.bf16.msra.mxu0 0
    %128 = vmatprep.subr.bf16.mxu0 0
    %129 = vmatpush1.bf16.msra.mxu0 0
    %130 = vmatprep.mubr.bf16.mxu0 0
    %131 = vmatmul.mubr.bf16.gmra.mrb[0].mxu0 %v89
    %v132 = vpop.f32.mrb[0].mxu0
    %v133 = vadd.f32 0.0, %v132
    %v134 = vpop.f32.mrb[0].mxu0
    %v135 = vpop.f32.mrb[0].mxu0
    %v136 = vpop.f32.mrb[0].mxu0
    %137 = vdwg.mxu0
    %v139 = vsel %vm70, %v76, 0
    %141 = vmatprep.subr.bf16.mxu0 0
    %142 = vmatpush1.bf16.msra.mxu0 %v96
    %143 = vmatprep.subr.bf16.mxu0 0
    %144 = vmatpush1.bf16.msra.mxu0 0
    %145 = vmatprep.subr.bf16.mxu0 0
    %146 = vmatpush1.bf16.msra.mxu0 0
    %147 = vmatprep.subr.bf16.mxu0 0
    %148 = vmatpush1.bf16.msra.mxu0 0
    %149 = vmatprep.subr.bf16.mxu0 0
    %150 = vmatpush1.bf16.msra.mxu0 0
    %151 = vmatprep.subr.bf16.mxu0 0
    %152 = vmatpush1.bf16.msra.mxu0 0
    %153 = vmatprep.subr.bf16.mxu0 0
    %154 = vmatpush1.bf16.msra.mxu0 0
    %155 = vmatprep.subr.bf16.mxu0 0
    %156 = vmatpush1.bf16.msra.mxu0 0
    %157 = vmatprep.subr.bf16.mxu0 0
    %158 = vmatpush1.bf16.msra.mxu0 0
    %159 = vmatprep.subr.bf16.mxu0 0
    %160 = vmatpush1.bf16.msra.mxu0 0
    %161 = vmatprep.subr.bf16.mxu0 0
    %162 = vmatpush1.bf16.msra.mxu0 0
    %163 = vmatprep.subr.bf16.mxu0 0
    %164 = vmatpush1.bf16.msra.mxu0 0
    %165 = vmatprep.subr.bf16.mxu0 0
    %166 = vmatpush1.bf16.msra.mxu0 0
    %167 = vmatprep.subr.bf16.mxu0 0
    %168 = vmatpush1.bf16.msra.mxu0 0
    %169 = vmatprep.subr.bf16.mxu0 0
    %170 = vmatpush1.bf16.msra.mxu0 0
    %171 = vmatprep.subr.bf16.mxu0 0
    %172 = vmatpush1.bf16.msra.mxu0 0
    %173 = vmatprep.mubr.bf16.mxu0 0
    %174 = vmatmul.mubr.bf16.gmra.mrb[0].mxu0 %v139
    %v175 = vpop.f32.mrb[0].mxu0
    %v176 = vadd.f32 %v133, %v175
    %v177 = vpop.f32.mrb[0].mxu0
    %v178 = vpop.f32.mrb[0].mxu0
    %v179 = vpop.f32.mrb[0].mxu0
    %180 = vdwg.mxu0
    %v181 = vsub.f32 %v54, %v176
    %v182 = vld [vmem:[#allocation2] sm:$0x1]
    %v183 = vmul.f32 %v181, %v181
    %v184 = vsel %vm70, %v183, 0.0
    %v185 = vrot.slane %v184, 4
    %v186 = vadd.f32 %v184, %v185
    %v187 = vrot.slane %v186, 2
    %v188 = vadd.f32 %v186, %v187
    %v189 = vrot.slane %v188, 1
    %v190 = vadd.f32 %v188, %v189
    %v191 = vadd.f32 %v182, %v190
    %vm192 = vcmask 114688
    %193 = vst.msk [vmem:[#allocation2] sm:$0x1] %vm192, %v191
    %v194 = vlaneseq
    %v195 = vshrl.u32 %v194, 7
    %vm196 = vcmp.eq.s32.totalorder %v195, 0
    %v197 = vld [vmem:[#allocation2] sm:$0x1]
    %v199 = vlaneseq
    %v200 = vshrl.u32 %v199, 7
    %v201 = vsub.s32 0, %v200
    %v202 = vrot.slane %v197, %v201
    %v204 = vsel %vm196, %v202, 0.0
    %205 = vst [vmem:[#allocation9] sm:$0xff] %v204
    // Predicated region
    $region26: #{tpu_custom_call.1} parent=1 // pred_check
      _
    $region27: #{tpu_custom_call.1} parent=1 // pred_check_branch
      %207 = sbr.rel (0) target = $region29
    $region28: #{tpu_custom_call.1} parent=1 // pred_region
      %s209 = ssub.s32 128, 128
      %210 = vsyncadd [#allocation5], %s209
      %s212 = sshll.u32 [#allocation9], 4
      %s213 = int_to_ptr.vmem [resolvable:$true] %s212
      %215 = dma.vmem_to_hbm [thread:$0]  %s213, 128, %s3, [#allocation5]
    $region29: #{tpu_custom_call.1} parent=1 // pred_fallthru
      _
    // Predicated region
    $region30: #{tpu_custom_call.1} parent=1 // pred_check
      _
    $region31: #{tpu_custom_call.1} parent=1 // pred_check_branch
      %217 = sbr.rel (0) target = $region33
    $region32: #{tpu_custom_call.1} parent=1 // pred_region
      %218 = dma.done [#allocation5], 128
    $region33: #{tpu_custom_call.1} parent=1 // pred_fallthru
      _
    %219 = vsyncpa [#allocation4], 1
    %220 = vsyncpa [#allocation7], 1
    %221 = vsyncpa [#allocation5], 1

</llo_original>
